<compile_context>
chip_gen: v7x
topology: tpu7x:2x2x1
jax: 0.10.0
libtpu: 0.0.40
codegen_flags: <defaults>
</compile_context>

<pallas_src>
import functools

import jax
import jax.numpy as jnp
import numpy as np
from jax.experimental import pallas as pl
from jax.experimental.pallas import tpu as pltpu


def _round_up(x, m):
    return ((x + m - 1) // m) * m


def _cdiv(a, b):
    return -(-a // b)


# ----------------------------- Pallas kernels ------------------------------ #
# Transposed, lane-dense layout: the walker axis is the 128-lane axis for
# inputs, intermediates and outputs.  xT tile: (Dp, TILE_N), Dp = 8.

def _psi_kernel(x_ref, a_ref, v_ref, psi_ref, *, bb):
    """psi = exp(-0.5*||x W + b||^2) via the folded Gram form.

    g  = A x^T + v           (A = W W^T zero-padded, v = W b^T)
    s0 = x.(g + v) + ||b||^2 = x A x^T + 2 x.v + ||b||^2 = ||x W + b||^2
    Padded rows of xT are zero, so they contribute nothing to s0.
    """
    xT = x_ref[...]                                            # (Dp, TN)
    v = v_ref[...]                                             # (Dp, 1)
    gT = jnp.dot(a_ref[...], xT, preferred_element_type=jnp.float32) + v
    s0 = jnp.sum(xT * (gT + v), axis=0, keepdims=True) + bb    # (1, TN)
    psi_ref[...] = jnp.exp(-0.5 * s0)


def _psi_ke_kernel(x_ref, a_ref, v_ref, c_ref, psi_ref, ke_ref,
                   *, eps, inv_eps2, bb, twocm1):
    """Fused psi + FD kinetic energy (exact expansion of the reference FD loop).

    psi(x ± eps e_d) = psi0 * c_d * exp(∓ eps g_d),
        c_d = exp(-0.5 eps^2 ||W_d||^2),   g_d = (A x^T + v)_d
    sum_d (psi+ + psi- - 2 psi0)
        = psi0 * sum_d [ c_d (e^{-a_d}+e^{+a_d}) - 2 ],  a_d = eps g_d
        = psi0 * ( sum_d c_d (e^{a_d}-1)^2 e^{-a_d}  +  2 sum_d (c_d - 1) )
    Zero-padded rows have g_d = 0 exactly, so they contribute 0; the constant
    `twocm1` = 2*sum_d(c_d-1) is over real dims only (host float64 expm1).
    """
    xT = x_ref[...]                                            # (Dp, TN)
    v = v_ref[...]                                             # (Dp, 1)
    gT = jnp.dot(a_ref[...], xT, preferred_element_type=jnp.float32) + v
    s0 = jnp.sum(xT * (gT + v), axis=0, keepdims=True) + bb    # (1, TN)
    psi0 = jnp.exp(-0.5 * s0)                                  # (1, TN)

    ep = jnp.exp(eps * gT)                                     # (Dp, TN)
    em = jnp.exp(-eps * gT)                                    # (Dp, TN)
    dm = ep - 1.0
    excess = jnp.sum(c_ref[...] * (dm * dm * em), axis=0, keepdims=True)

    ke_ref[...] = (-0.5 * inv_eps2) * psi0 * (excess + twocm1)
    psi_ref[...] = psi0


# ------------------------------- wrapper ----------------------------------- #

class WaveFunctionPallas:
    """JAX/Pallas port of vart WaveFunction (concrete Gaussian-MLP ansatz)."""

    def __init__(self, nelec, ndim, hidden=32, kinetic='fd', max_tile_n=8192,
                 key=jax.random.PRNGKey(0)):
        self.nelec = nelec
        self.ndim = ndim
        self.ndim_tot = nelec * ndim
        self.hidden = hidden
        self.kinetic = kinetic
        assert max_tile_n % 128 == 0, "walker tile must be a multiple of 128 lanes"
        self.max_tile_n = max_tile_n

        kw, kb = jax.random.split(key)
        # deterministic synthetic parameters (no checkpoint load)
        W = 0.1 * jax.random.normal(kw, (self.ndim_tot, hidden), jnp.float32)
        b = 0.1 * jax.random.normal(kb, (1, hidden), jnp.float32)
        self.W, self.b = W, b

        # ---- walker-independent derived tensors (hoisted; hidden dim folded) --
        d = self.ndim_tot
        dp = _round_up(d, 8)                     # sublane-padded "per-dim" axis
        self.ndim_pad = dp
        W64 = np.asarray(W, np.float64)
        b64 = np.asarray(b, np.float64)
        A_pad = np.zeros((dp, dp), np.float32)
        A_pad[:d, :d] = (W64 @ W64.T).astype(np.float32)       # A = W W^T
        v_pad = np.zeros((dp, 1), np.float32)
        v_pad[:d, 0] = (W64 @ b64.T)[:, 0].astype(np.float32)  # v = W b^T
        self.A_pad = jnp.asarray(A_pad)
        self.v_pad = jnp.asarray(v_pad)
        self.bb = float(np.sum(b64 * b64))                     # ||b||^2
        self._wsq64 = np.sum(W64 * W64, axis=1, keepdims=True)  # (D, 1) float64

        self._cache = {}   # (kind, n[, eps]) -> jitted callable

    # --- tiling / layout helpers ---------------------------------------------
    def _tiling(self, n):
        """Adaptive tiling: pad to 128 lanes, keep >=2 grid steps when possible."""
        n128 = _round_up(max(int(n), 1), 128)
        grid = max(2 if n128 >= 256 else 1, _cdiv(n128, self.max_tile_n))
        tile = _round_up(_cdiv(n128, grid), 128)
        return tile, tile * grid, grid

    def _prep(self, pos, n, n_pad):
        """(n, D) -> lane-dense transposed (Dp, n_pad), zero padded (inside jit)."""
        xT = jnp.transpose(pos.astype(jnp.float32))            # (D, n)
        return jnp.pad(xT, ((0, self.ndim_pad - self.ndim_tot), (0, n_pad - n)))

    # --- psi-only pallas_call --------------------------------------------------
    def _build_psi_call(self, tile, n_pad, grid):
        dp = self.ndim_pad
        kern = functools.partial(_psi_kernel, bb=self.bb)
        return pl.pallas_call(
            kern,
            out_shape=jax.ShapeDtypeStruct((1, n_pad), jnp.float32),
            grid=(grid,),
            in_specs=[
                pl.BlockSpec((dp, tile), lambda i: (0, i)),   # xT tile (lane-dense)
                pl.BlockSpec((dp, dp), lambda i: (0, 0)),     # A = W W^T (pinned)
                pl.BlockSpec((dp, 1), lambda i: (0, 0)),      # v = W b^T (pinned)
            ],
            out_specs=pl.BlockSpec((1, tile), lambda i: (0, i)),
            compiler_params=pltpu.CompilerParams(
                dimension_semantics=("parallel",)),
            cost_estimate=pl.CostEstimate(
                flops=2 * dp * dp * n_pad + 6 * dp * n_pad,
                transcendentals=n_pad,
                bytes_accessed=4 * (dp * n_pad + n_pad)),
        )

    def _forward_fn(self, n):
        key = ('fwd', n)
        fn = self._cache.get(key)
        if fn is None:
            tile, n_pad, grid = self._tiling(n)
            call = self._build_psi_call(tile, n_pad, grid)
            A, v = self.A_pad, self.v_pad

            def f(pos):
                row = call(self._prep(pos, n, n_pad), A, v)
                return row[0, :n].reshape(n, 1)

            fn = jax.jit(f)
            self._cache[key] = fn
        return fn

    def forward(self, pos):
        return self._forward_fn(pos.shape[0])(pos)

    __call__ = forward

    # --- pdf (squared inside the same jit; no second pass over pos) ------------
    def _pdf_fn(self, n):
        key = ('pdf', n)
        fn = self._cache.get(key)
        if fn is None:
            tile, n_pad, grid = self._tiling(n)
            call = self._build_psi_call(tile, n_pad, grid)
            A, v = self.A_pad, self.v_pad

            def f(pos):
                row = call(self._prep(pos, n, n_pad), A, v)
                p = row[0, :n]
                return p * p

            fn = jax.jit(f)
            self._cache[key] = fn
        return fn

    def pdf(self, pos):
        return self._pdf_fn(pos.shape[0])(pos)

    # --- fused psi + kinetic energy ---------------------------------------------
    def _fused_fn(self, n, eps):
        eps = float(eps)
        key = ('fused', n, eps)
        fn = self._cache.get(key)
        if fn is None:
            tile, n_pad, grid = self._tiling(n)
            dp, d = self.ndim_pad, self.ndim_tot

            # eps-dependent, walker-independent constants (host float64)
            z = -0.5 * eps * eps * self._wsq64                  # (D, 1)
            c_pad = np.ones((dp, 1), np.float32)
            c_pad[:d, 0] = np.exp(z)[:, 0].astype(np.float32)   # c_d
            twocm1 = float(2.0 * np.sum(np.expm1(z)))           # 2*sum(c_d - 1)
            c_pad = jnp.asarray(c_pad)

            kern = functools.partial(
                _psi_ke_kernel, eps=eps, inv_eps2=1.0 / (eps * eps),
                bb=self.bb, twocm1=twocm1)
            call = pl.pallas_call(
                kern,
                out_shape=(jax.ShapeDtypeStruct((1, n_pad), jnp.float32),
                           jax.ShapeDtypeStruct((1, n_pad), jnp.float32)),
                grid=(grid,),
                in_specs=[
                    pl.BlockSpec((dp, tile), lambda i: (0, i)),   # xT tile
                    pl.BlockSpec((dp, dp), lambda i: (0, 0)),     # A
                    pl.BlockSpec((dp, 1), lambda i: (0, 0)),      # v
                    pl.BlockSpec((dp, 1), lambda i: (0, 0)),      # c
                ],
                out_specs=(pl.BlockSpec((1, tile), lambda i: (0, i)),
                           pl.BlockSpec((1, tile), lambda i: (0, i))),
                compiler_params=pltpu.CompilerParams(
                    dimension_semantics=("parallel",)),
                cost_estimate=pl.CostEstimate(
                    flops=2 * dp * dp * n_pad + 16 * dp * n_pad,
                    transcendentals=(1 + 2 * dp) * n_pad,
                    bytes_accessed=4 * (dp * n_pad + 2 * n_pad)),
            )
            A, v = self.A_pad, self.v_pad

            def f(pos):
                psi_row, ke_row = call(self._prep(pos, n, n_pad), A, v, c_pad)
                return (psi_row[0, :n].reshape(n, 1),
                        ke_row[0, :n].reshape(n, 1))

            fn = jax.jit(f)
            self._cache[key] = fn
        return fn

    def psi_and_kinetic_energy(self, pos, eps=1e-3):
        return self._fused_fn(pos.shape[0], eps)(pos)

    def kinetic_energy_finite_difference(self, pos, eps=1e-3):
        return self.psi_and_kinetic_energy(pos, eps=eps)[1]

    def kinetic_energy(self, pos, out=None):
        if self.kinetic == 'fd':
            return self.kinetic_energy_finite_difference(pos)
        # TODO(synk): kinetic='auto' (autograd Hessian through the Pallas kernel)
        # needs a custom_vjp; not implemented here.
        raise ValueError('kinetic %s not recognized' % self.kinetic)

    # NOTE: _psi_ke_kernel is mathematically exact only for this Gaussian-MLP
    # ansatz; swapping the forward network requires rewriting the FD kernel.
    # TODO(synk): nuclear_potential / electronic_potential / nuclear_repulsion
    # (and hence local_energy / energy / variance) are abstract in the
    # reference module and are intentionally omitted.


# --------------------- host float64 reference (checks) ---------------------- #

def _psi_ref_np(pos, W, b):
    h = pos @ W + b
    return np.exp(-0.5 * np.sum(h * h, axis=-1, keepdims=True))


def _ke_fd_ref_np(pos, W, b, eps):
    """Literal float64 translation of the reference FD loop."""
    nwalk, ndim = pos.shape
    out = np.zeros((nwalk, 1), np.float64)
    for icol in range(ndim):
        feps = -2.0 * _psi_ref_np(pos, W, b)
        p = pos.copy(); p[:, icol] += eps
        feps = feps + _psi_ref_np(p, W, b)
        p = pos.copy(); p[:, icol] -= eps
        feps = feps + _psi_ref_np(p, W, b)
        out = out + feps / eps ** 2
    return -0.5 * out


# --------------------------------- main ------------------------------------ #

if __name__ == "__main__":
    nelec, ndim, hidden = 2, 3, 32
    nwalk = 600          # deliberately not a tile multiple (exercises padding)
    eps = 0.05           # numerically meaningful FD step for the f32 kernel

    wf = WaveFunctionPallas(nelec, ndim, hidden=hidden, kinetic='fd',
                            key=jax.random.PRNGKey(0))
    pos = jax.random.normal(jax.random.PRNGKey(1), (nwalk, wf.ndim_tot),
                            jnp.float32)

    # sanity: adaptive tiling gives >= 2 grid steps here (v7x 2-TC sharding)
    _tile, _n_pad, _grid = wf._tiling(nwalk)
    assert _grid >= 2 and _n_pad >= nwalk and _tile % 128 == 0

    # run kernels
    psi = jax.block_until_ready(wf.forward(pos))
    psi_fused, ke = wf.psi_and_kinetic_energy(pos, eps=eps)
    psi_fused = jax.block_until_ready(psi_fused)
    ke = jax.block_until_ready(ke)
    dens = jax.block_until_ready(wf.pdf(pos))
    ke_default = jax.block_until_ready(wf.kinetic_energy(pos))  # default-eps path

    # correctness checks against a host float64 reference
    pos64 = np.asarray(pos, np.float64)
    W64 = np.asarray(wf.W, np.float64)
    b64 = np.asarray(wf.b, np.float64)
    psi_ref = _psi_ref_np(pos64, W64, b64)
    ke_ref = _ke_fd_ref_np(pos64, W64, b64, eps)

    np.testing.assert_allclose(np.asarray(psi), psi_ref, rtol=5e-4, atol=1e-6)
    np.testing.assert_allclose(np.asarray(psi_fused), np.asarray(psi),
                               rtol=1e-5, atol=1e-7)
    np.testing.assert_allclose(np.asarray(dens), (psi_ref ** 2).reshape(-1),
                               rtol=1e-3, atol=1e-6)
    np.testing.assert_allclose(np.asarray(ke), ke_ref, rtol=1e-2, atol=5e-3)

    assert psi.shape == (nwalk, 1) and ke.shape == (nwalk, 1)
    assert dens.shape == (nwalk,)
    assert ke_default.shape == (nwalk, 1)
    assert bool(np.all(np.isfinite(np.asarray(ke_default))))

    print("KERNEL_OK")
</pallas_src>

<mosaic_0001>
module attributes {stable_mosaic.version = 11 : i64} {
  func.func @_psi_kernel(%arg0: i32, %arg1: memref<8x384xf32, #tpu.memory_space<vmem>>, %arg2: memref<8x8xf32, #tpu.memory_space<vmem>>, %arg3: memref<8x1xf32, #tpu.memory_space<vmem>>, %arg4: memref<1x384xf32, #tpu.memory_space<vmem>>) attributes {dimension_semantics = [#tpu.dimension_semantics<parallel>], iteration_bounds = array<i64: 2>, scalar_prefetch = 0 : i64, scratch_operands = 0 : i64, tpu.core_type = #tpu.core_type<tc>, window_params = [{transform_indices = @transform_0, window_bounds = array<i64: 8, 384>}, {pipeline_mode = #tpu.pipeline_mode<synchronous>, transform_indices = @transform_1, window_bounds = array<i64: 8, 8>}, {pipeline_mode = #tpu.pipeline_mode<synchronous>, transform_indices = @transform_2, window_bounds = array<i64: 8, 1>}, {transform_indices = @transform_3, window_bounds = array<i64: 1, 384>}]} {
    %c0 = arith.constant 0 : index
    %c0_0 = arith.constant 0 : index
    %0 = vector.load %arg1[%c0, %c0_0] : memref<8x384xf32, #tpu.memory_space<vmem>>, vector<8x384xf32>
    %c0_1 = arith.constant 0 : index
    %c0_2 = arith.constant 0 : index
    %1 = vector.load %arg3[%c0_1, %c0_2] : memref<8x1xf32, #tpu.memory_space<vmem>>, vector<8x1xf32>
    %c0_3 = arith.constant 0 : index
    %c0_4 = arith.constant 0 : index
    %2 = vector.load %arg2[%c0_3, %c0_4] : memref<8x8xf32, #tpu.memory_space<vmem>>, vector<8x8xf32>
    %cst = arith.constant dense<0.000000e+00> : vector<8x384xf32>
    %3 = tpu.matmul %2, %0, %cst {dimension_numbers = #tpu.dot_dimension_numbers<[1], [0], [0], [1], [0, 0, 1, 1], [], []>} : vector<8x8xf32>, vector<8x384xf32>, vector<8x384xf32> -> vector<8x384xf32>
    %4 = vector.broadcast %1 : vector<8x1xf32> to vector<8x384xf32>
    %5 = arith.addf %3, %4 : vector<8x384xf32>
    %6 = vector.broadcast %1 : vector<8x1xf32> to vector<8x384xf32>
    %7 = arith.addf %5, %6 : vector<8x384xf32>
    %8 = arith.mulf %0, %7 : vector<8x384xf32>
    %cst_5 = arith.constant dense<0.000000e+00> : vector<384xf32>
    %9 = vector.multi_reduction <add>, %8, %cst_5 [0] : vector<8x384xf32> to vector<384xf32>
    %10 = vector.shape_cast %9 : vector<384xf32> to vector<1x384xf32>
    %cst_6 = arith.constant 0.421346158 : f32
    %11 = vector.broadcast %cst_6 : f32 to vector<1x384xf32>
    %12 = arith.addf %10, %11 : vector<1x384xf32>
    %cst_7 = arith.constant -5.000000e-01 : f32
    %13 = vector.broadcast %cst_7 : f32 to vector<1x384xf32>
    %14 = arith.mulf %13, %12 : vector<1x384xf32>
    %15 = math.exp %14 : vector<1x384xf32>
    %c0_8 = arith.constant 0 : index
    %c0_9 = arith.constant 0 : index
    %16 = vector.load %arg4[%c0_8, %c0_9] : memref<1x384xf32, #tpu.memory_space<vmem>>, vector<1x384xf32>
    tpu.vector_store %arg4[%c0_8, %c0_9], %15 {strides = array<i32>} : memref<1x384xf32, #tpu.memory_space<vmem>>, vector<1x384xf32>,
    return
  }
  func.func @transform_0(%arg0: i32) -> (i32, i32) {
    %c0_i32 = arith.constant 0 : i32
    %c0_i32_0 = arith.constant 0 : i32
    return %c0_i32, %arg0 : i32, i32
  }
  func.func @transform_1(%arg0: i32) -> (i32, i32) {
    %c0_i32 = arith.constant 0 : i32
    %c0_i32_0 = arith.constant 0 : i32
    %c0_i32_1 = arith.constant 0 : i32
    return %c0_i32, %c0_i32_0 : i32, i32
  }
  func.func @transform_2(%arg0: i32) -> (i32, i32) {
    %c0_i32 = arith.constant 0 : i32
    %c0_i32_0 = arith.constant 0 : i32
    %c0_i32_1 = arith.constant 0 : i32
    return %c0_i32, %c0_i32_0 : i32, i32
  }
  func.func @transform_3(%arg0: i32) -> (i32, i32) {
    %c0_i32 = arith.constant 0 : i32
    %c0_i32_0 = arith.constant 0 : i32
    return %c0_i32, %arg0 : i32, i32
  }
}

</mosaic_0001>

<llo_original>
// kernel: f.1
$region0: #{f.1}
  #allocation0 [shape = 'u32[]', space=smem, size = 0x4, offset = 0x4, fixed_abs, tag = 'smem constant byte address 0x4 - core index']
  #allocation1 [shape = 'u32[144,128]{1,0:T(1,128)}', space=vmem, size = 0x12000, scoped, tag = 'internal scratch']
  %s0 = inlined_call_operand.vmem [shape: f32[8,768], index: 0, kind: input, shape index: {}]
  %s1 = inlined_call_operand.vmem [shape: f32[8,8], index: 1, kind: input, shape index: {}]
  %s2 = inlined_call_operand.vmem [shape: f32[8,1], index: 2, kind: input, shape index: {}]
  %s3 = inlined_call_operand.vmem [shape: f32[1,768], index: 3, kind: output, shape index: {}]
  %s4 = sld [smem:[#allocation0]]
  $region45: #{f.1} parent=0
    _
  %s6 = ssub.s32 1, %s4
  %s7 = scalar_select 0, %s6, %s4
  loop: start=0, step=1, limit=4
  $region2: #{f.1} parent=0 // loop_pre_header
    _
  $region3: #{f.1} parent=0 // loop_header
    %s9 = sphi 0, %s13
    %p10 = scmp.ge.s32.totalorder %s9, 4
    %s19 = sphi 0, %s21
    %s22 = sphi 0, %s19
    %s23 = sphi 0, %s22
    %s39 = sphi 0, %s23
    %s43 = sphi 0, %s43
    %s45 = sphi 0, %s43
    %s46 = sphi 0, %s45
    %s60 = sphi 0, %s46
    %s64 = sphi 0, %s64
    %s66 = sphi 0, %s64
    %s67 = sphi 0, %s66
    %s81 = sphi 0, %s67
    %s87 = sphi 0, %s89
    %s90 = sphi 0, %s87
    %s91 = sphi 0, %s90
    %s107 = sphi 0, %s91
  $region4: #{f.1} parent=0 // loop_header_branch
    %12 = sbr.rel (%p10) target = $region8
  $region5: #{f.1} parent=0 // loop_body
    %s14 = ssub.s32 %s9, 1
    %s15 = ssub.s32 %s9, 2
    %s16 = sadd.s32 %s9, 1
    %s17 = ssub.s32 %s9, %s16
    %p18 = scmp.eq.s32.totalorder %s17, 0
    %s20 = sadd.s32 %s19, 1
    %s21 = scalar_select %p18, %s19, %s20
    %p24 = pneg %p18
    %p25 = scmp.eq.s32.totalorder %s9, 1
    %p26 = por %p24, %p25
    %p27 = scmp.ne.s32.totalorder %s19, %s22
    %p28 = scmp.eq.s32.totalorder %s9, 0
    %p29 = por %p27, %p28
    %p30 = scmp.ne.s32.totalorder %s19, %s22
    %p31 = scmp.eq.s32.totalorder %s14, 1
    %p32 = por %p30, %p31
    %p33 = scmp.ne.s32.totalorder %s22, %s23
    %p34 = scmp.eq.s32.totalorder %s14, 0
    %p35 = por %p33, %p34
    %p36 = scmp.ne.s32.totalorder %s22, %s23
    %p37 = scmp.eq.s32.totalorder %s15, 1
    %p38 = por %p36, %p37
    %p40 = scmp.ne.s32.totalorder %s23, %s39
    %p41 = scmp.eq.s32.totalorder %s15, 0
    %p42 = por %p40, %p41
    %s44 = sadd.s32 %s43, 1
    %p47 = scmp.eq.s32.totalorder %s9, 1
    %p48 = scmp.ne.s32.totalorder %s43, %s45
    %p49 = scmp.eq.s32.totalorder %s9, 0
    %p50 = por %p48, %p49
    %p51 = scmp.ne.s32.totalorder %s43, %s45
    %p52 = scmp.eq.s32.totalorder %s14, 1
    %p53 = por %p51, %p52
    %p54 = scmp.ne.s32.totalorder %s45, %s46
    %p55 = scmp.eq.s32.totalorder %s14, 0
    %p56 = por %p54, %p55
    %p57 = scmp.ne.s32.totalorder %s45, %s46
    %p58 = scmp.eq.s32.totalorder %s15, 1
    %p59 = por %p57, %p58
    %p61 = scmp.ne.s32.totalorder %s46, %s60
    %p62 = scmp.eq.s32.totalorder %s15, 0
    %p63 = por %p61, %p62
    %s65 = sadd.s32 %s64, 1
    %p68 = scmp.eq.s32.totalorder %s9, 1
    %p69 = scmp.ne.s32.totalorder %s64, %s66
    %p70 = scmp.eq.s32.totalorder %s9, 0
    %p71 = por %p69, %p70
    %p72 = scmp.ne.s32.totalorder %s64, %s66
    %p73 = scmp.eq.s32.totalorder %s14, 1
    %p74 = por %p72, %p73
    %p75 = scmp.ne.s32.totalorder %s66, %s67
    %p76 = scmp.eq.s32.totalorder %s14, 0
    %p77 = por %p75, %p76
    %p78 = scmp.ne.s32.totalorder %s66, %s67
    %p79 = scmp.eq.s32.totalorder %s15, 1
    %p80 = por %p78, %p79
    %p82 = scmp.ne.s32.totalorder %s67, %s81
    %p83 = scmp.eq.s32.totalorder %s15, 0
    %p84 = por %p82, %p83
    %s85 = ssub.s32 %s9, %s16
    %p86 = scmp.eq.s32.totalorder %s85, 0
    %s88 = sadd.s32 %s87, 1
    %s89 = scalar_select %p86, %s87, %s88
    %p92 = pneg %p86
    %p93 = scmp.eq.s32.totalorder %s9, 1
    %p94 = por %p92, %p93
    %p95 = scmp.ne.s32.totalorder %s87, %s90
    %p96 = scmp.eq.s32.totalorder %s9, 0
    %p97 = por %p95, %p96
    %p98 = scmp.ne.s32.totalorder %s87, %s90
    %p99 = scmp.eq.s32.totalorder %s14, 1
    %p100 = por %p98, %p99
    %p101 = scmp.ne.s32.totalorder %s90, %s91
    %p102 = scmp.eq.s32.totalorder %s14, 0
    %p103 = por %p101, %p102
    %p104 = scmp.ne.s32.totalorder %s90, %s91
    %p105 = scmp.eq.s32.totalorder %s15, 1
    %p106 = por %p104, %p105
    %p108 = scmp.ne.s32.totalorder %s91, %s107
    %p109 = scmp.eq.s32.totalorder %s15, 0
    %p110 = por %p108, %p109
    %p111 = scmp.le.s32.totalorder 1, %s9
    %p112 = scmp.lt.s32.totalorder %s9, 3
    %p113 = pnand %p111, %p112
    %p114 = pneg %p113
    // Predicated region
    $region9: #{f.1} parent=5 // pred_check
      _
    $region10: #{f.1} parent=5 // pred_check_branch
      %116 = sbr.rel (%p113) target = $region12
    $region11: #{f.1} parent=5 // pred_region
      %s117 = ssub.s32 %s9, 1
      // Predicated region
      $region13: #{f.1} parent=11 // pred_check
        %p118 = pneg %p56
      $region14: #{f.1} parent=11 // pred_check_branch
        %120 = sbr.rel (%p118) target = $region16
      $region15: #{f.1} parent=11 // pred_region
        _
      $region16: #{f.1} parent=11 // pred_fallthru
        _
      // Predicated region
      $region17: #{f.1} parent=11 // pred_check
        %p121 = pneg %p77
      $region18: #{f.1} parent=11 // pred_check_branch
        %123 = sbr.rel (%p121) target = $region20
      $region19: #{f.1} parent=11 // pred_region
        _
      $region20: #{f.1} parent=11 // pred_fallthru
        _
    $region12: #{f.1} parent=5 // pred_fallthru
      _
    %p124 = scmp.lt.s32.totalorder %s9, 2
    // Predicated region
    $region21: #{f.1} parent=5 // pred_check
      %p125 = pneg %p124
    $region22: #{f.1} parent=5 // pred_check_branch
      %127 = sbr.rel (%p125) target = $region24
    $region23: #{f.1} parent=5 // pred_region
      // Predicated region
      $region25: #{f.1} parent=23 // pred_check
        %p128 = pneg %p29
      $region26: #{f.1} parent=23 // pred_check_branch
        %130 = sbr.rel (%p128) target = $region28
      $region27: #{f.1} parent=23 // pred_region
        %s131 = smul.u32 3, %s9
        %p132 = scmp.lt.s32.totalorder %s131, 5
        %s133 = scalar_select %p132, %s131, 5
        %s134 = smul.addr %s133, 8
        %s135 = scalar_lea.vmem %s0, %s134
        %s136 = smul.u32 3, %s9
      $region28: #{f.1} parent=23 // pred_fallthru
        _
    $region24: #{f.1} parent=5 // pred_fallthru
      _
    %p137 = scmp.le.s32.totalorder 1, %s9
    %p138 = scmp.lt.s32.totalorder %s9, 3
    %p139 = pnand %p137, %p138
    %p140 = pneg %p139
    // Predicated region
    $region29: #{f.1} parent=5 // pred_check
      _
    $region30: #{f.1} parent=5 // pred_check_branch
      %142 = sbr.rel (%p139) target = $region32
    $region31: #{f.1} parent=5 // pred_region
      %s143 = ssub.s32 %s9, 1
      %s144 = smul.u32 3, %s14
      %p145 = scmp.lt.s32.totalorder %s144, 5
      %s146 = scalar_select %p145, %s144, 5
      %s147 = smul.addr %s146, 8
      %s148 = scalar_lea.vmem %s0, %s147
      %p149 = pneg %p35
      %p150 = pneg %p32
      %p151 = pneg %p56
      %p152 = pneg %p53
      %p153 = pneg %p77
      %p154 = pneg %p74
      %p155 = pneg %p103
      %p156 = pneg %p100
      %s157 = smul.u32 3, %s14
      %p158 = scmp.lt.s32.totalorder %s157, 5
      %s159 = scalar_select %p158, %s157, 5
      %s160 = scalar_lea.vmem %s3, %s159
      %s161 = smul.u32 3, %s14
      %p162 = scmp.lt.s32.totalorder %s161, 5
      %s163 = scalar_select %p162, %s161, 5
      %s164 = smul.addr %s163, 8
      %s165 = scalar_lea.vmem %s0, %s164
      %s166 = smul.u32 3, %s14
      %s167 = smul.u32 3, %s14
      %p168 = scmp.lt.s32.totalorder %s167, 5
      %s169 = scalar_select %p168, %s167, 5
      %s170 = scalar_lea.vmem %s3, %s169
      %s171 = smul.u32 3, %s14
      %v172 = vld [vmem:[%s165] sm:$0xff]
      %v173 = vld [vmem:[%s165 + $0x8] sm:$0xff]
      %v174 = vld [vmem:[%s165 + $0x10] sm:$0xff]
      %v175 = vld [vmem:[%s2] sm:$0xff]
      %v176 = vld [vmem:[%s1] sm:$0xff]
      %178 = vset.pattern.permute.xlu0 0
      %179 = vperm.xlu0 %178, %v175
      %v180 = vpop.permute.xlu0 %179
      %vm182 = vcmask 64512
      %v184 = vsel %vm182, %v176, 0
      %186 = vmatprep.subr.mxu0 %v173
      %187 = vmatpush1.msra.mxu0 %v172
      %188 = vmatprep.subr.mxu0 0.0
      %189 = vmatpush1.msra.mxu0 0.0
      %190 = vmatprep.subr.mxu0 0.0
      %191 = vmatpush1.msra.mxu0 0.0
      %192 = vmatprep.subr.mxu0 0.0
      %193 = vmatpush1.msra.mxu0 0.0
      %194 = vmatprep.subr.mxu0 0.0
      %195 = vmatpush1.msra.mxu0 0.0
      %196 = vmatprep.subr.mxu0 0.0
      %197 = vmatpush1.msra.mxu0 0.0
      %198 = vmatprep.subr.mxu0 0.0
      %199 = vmatpush1.msra.mxu0 0.0
      %200 = vmatprep.subr.mxu0 0.0
      %201 = vmatpush1.msra.mxu0 0.0
      %202 = vmatprep.subr.mxu0 0.0
      %203 = vmatpush1.msra.mxu0 0.0
      %204 = vmatprep.subr.mxu0 0.0
      %205 = vmatpush1.msra.mxu0 0.0
      %206 = vmatprep.subr.mxu0 0.0
      %207 = vmatpush1.msra.mxu0 0.0
      %208 = vmatprep.subr.mxu0 0.0
      %209 = vmatpush1.msra.mxu0 0.0
      %210 = vmatprep.subr.mxu0 0.0
      %211 = vmatpush1.msra.mxu0 0.0
      %212 = vmatprep.subr.mxu0 0.0
      %213 = vmatpush1.msra.mxu0 0.0
      %214 = vmatprep.subr.mxu0 0.0
      %215 = vmatpush1.msra.mxu0 0.0
      %216 = vmatprep.subr.mxu0 0.0
      %217 = vmatpush1.msra.mxu0 0.0
      %218 = vmatprep.subr.mxu0 0.0
      %219 = vmatpush1.msra.mxu0 0.0
      %220 = vmatprep.subr.mxu0 0.0
      %221 = vmatpush1.msra.mxu0 0.0
      %222 = vmatprep.subr.mxu0 0.0
      %223 = vmatpush1.msra.mxu0 0.0
      %224 = vmatprep.subr.mxu0 0.0
      %225 = vmatpush1.msra.mxu0 0.0
      %226 = vmatprep.subr.mxu0 0.0
      %227 = vmatpush1.msra.mxu0 0.0
      %228 = vmatprep.subr.mxu0 0.0
      %229 = vmatpush1.msra.mxu0 0.0
      %230 = vmatprep.subr.mxu0 0.0
      %231 = vmatpush1.msra.mxu0 0.0
      %232 = vmatprep.subr.mxu0 0.0
      %233 = vmatpush1.msra.mxu0 0.0
      %234 = vmatprep.subr.mxu0 0.0
      %235 = vmatpush1.msra.mxu0 0.0
      %236 = vmatprep.subr.mxu0 0.0
      %237 = vmatpush1.msra.mxu0 0.0
      %238 = vmatprep.subr.mxu0 0.0
      %239 = vmatpush1.msra.mxu0 0.0
      %240 = vmatprep.subr.mxu0 0.0
      %241 = vmatpush1.msra.mxu0 0.0
      %242 = vmatprep.subr.mxu0 0.0
      %243 = vmatpush1.msra.mxu0 0.0
      %244 = vmatprep.subr.mxu0 0.0
      %245 = vmatpush1.msra.mxu0 0.0
      %246 = vmatprep.subr.mxu0 0.0
      %247 = vmatpush1.msra.mxu0 0.0
      %248 = vmatprep.subr.mxu0 0.0
      %249 = vmatpush1.msra.mxu0 0.0
      %250 = vmatprep.mubr.f32.mxu0 0.0
      %251 = vmatmul.mubr.f32.gmra.mrb[0].mxu0 %v184
      %v252 = vpop.f32.mrb[0].mxu0
      %v253 = vadd.f32 %v180, %v252
      %v254 = vpop.f32.mrb[0].mxu0
      %v255 = vadd.f32 %v180, %v254
      %256 = vdwg.mxu0
      %257 = vmatprep.subr.mxu0 0.0
      %258 = vmatpush1.msra.mxu0 %v174
      %259 = vmatprep.subr.mxu0 0.0
      %260 = vmatpush1.msra.mxu0 0.0
      %261 = vmatprep.subr.mxu0 0.0
      %262 = vmatpush1.msra.mxu0 0.0
      %263 = vmatprep.subr.mxu0 0.0
      %264 = vmatpush1.msra.mxu0 0.0
      %265 = vmatprep.subr.mxu0 0.0
      %266 = vmatpush1.msra.mxu0 0.0
      %267 = vmatprep.subr.mxu0 0.0
      %268 = vmatpush1.msra.mxu0 0.0
      %269 = vmatprep.subr.mxu0 0.0
      %270 = vmatpush1.msra.mxu0 0.0
      %271 = vmatprep.subr.mxu0 0.0
      %272 = vmatpush1.msra.mxu0 0.0
      %273 = vmatprep.subr.mxu0 0.0
      %274 = vmatpush1.msra.mxu0 0.0
      %275 = vmatprep.subr.mxu0 0.0
      %276 = vmatpush1.msra.mxu0 0.0
      %277 = vmatprep.subr.mxu0 0.0
      %278 = vmatpush1.msra.mxu0 0.0
      %279 = vmatprep.subr.mxu0 0.0
      %280 = vmatpush1.msra.mxu0 0.0
      %281 = vmatprep.subr.mxu0 0.0
      %282 = vmatpush1.msra.mxu0 0.0
      %283 = vmatprep.subr.mxu0 0.0
      %284 = vmatpush1.msra.mxu0 0.0
      %285 = vmatprep.subr.mxu0 0.0
      %286 = vmatpush1.msra.mxu0 0.0
      %287 = vmatprep.subr.mxu0 0.0
      %288 = vmatpush1.msra.mxu0 0.0
      %289 = vmatprep.subr.mxu0 0.0
      %290 = vmatpush1.msra.mxu0 0.0
      %291 = vmatprep.subr.mxu0 0.0
      %292 = vmatpush1.msra.mxu0 0.0
      %293 = vmatprep.subr.mxu0 0.0
      %294 = vmatpush1.msra.mxu0 0.0
      %295 = vmatprep.subr.mxu0 0.0
      %296 = vmatpush1.msra.mxu0 0.0
      %297 = vmatprep.subr.mxu0 0.0
      %298 = vmatpush1.msra.mxu0 0.0
      %299 = vmatprep.subr.mxu0 0.0
      %300 = vmatpush1.msra.mxu0 0.0
      %301 = vmatprep.subr.mxu0 0.0
      %302 = vmatpush1.msra.mxu0 0.0
      %303 = vmatprep.subr.mxu0 0.0
      %304 = vmatpush1.msra.mxu0 0.0
      %305 = vmatprep.subr.mxu0 0.0
      %306 = vmatpush1.msra.mxu0 0.0
      %307 = vmatprep.subr.mxu0 0.0
      %308 = vmatpush1.msra.mxu0 0.0
      %309 = vmatprep.subr.mxu0 0.0
      %310 = vmatpush1.msra.mxu0 0.0
      %311 = vmatprep.subr.mxu0 0.0
      %312 = vmatpush1.msra.mxu0 0.0
      %313 = vmatprep.subr.mxu0 0.0
      %314 = vmatpush1.msra.mxu0 0.0
      %315 = vmatprep.subr.mxu0 0.0
      %316 = vmatpush1.msra.mxu0 0.0
      %317 = vmatprep.subr.mxu0 0.0
      %318 = vmatpush1.msra.mxu0 0.0
      %319 = vmatprep.subr.mxu0 0.0
      %320 = vmatpush1.msra.mxu0 0.0
      %321 = vmatprep.mubr.f32.mxu0 0.0
      %322 = vmatmul.mubr.f32.gmra.mrb[0].mxu0 %v184
      %v323 = vpop.f32.mrb[0].mxu0
      %v324 = vadd.f32 %v180, %v323
      %v325 = vpop.f32.mrb[0].mxu0
      %326 = vdwg.mxu0
      %v327 = vadd.f32 %v253, %v180
      %v328 = vadd.f32 %v255, %v180
      %v329 = vadd.f32 %v324, %v180
      %v330 = vmul.f32 %v172, %v327
      %v331 = vmul.f32 %v173, %v328
      %v332 = vmul.f32 %v174, %v329
      %v333 = vrot.slane %v330, 4
      %v334 = vadd.f32 %v330, %v333
      %v335 = vrot.slane %v334, 2
      %v336 = vadd.f32 %v334, %v335
      %v337 = vrot.slane %v336, 1
      %v338 = vadd.f32 %v336, %v337
      %v339 = vrot.slane %v331, 4
      %v340 = vadd.f32 %v331, %v339
      %v341 = vrot.slane %v340, 2
      %v342 = vadd.f32 %v340, %v341
      %v343 = vrot.slane %v342, 1
      %v344 = vadd.f32 %v342, %v343
      %v345 = vrot.slane %v332, 4
      %v346 = vadd.f32 %v332, %v345
      %v347 = vrot.slane %v346, 2
      %v348 = vadd.f32 %v346, %v347
      %v349 = vrot.slane %v348, 1
      %v350 = vadd.f32 %v348, %v349
      %v351 = vadd.f32 %v338, 0.42134616
      %v352 = vadd.f32 %v344, 0.42134616
      %v353 = vadd.f32 %v350, 0.42134616
      %v354 = vmul.f32 %v351, -0.5
      %v355 = vmul.f32 %v352, -0.5
      %v356 = vmul.f32 %v353, -0.5
      %v357 = vmul.f32 %v354, 1.442695
      %v358 = vpow.pop %v357
      %v359 = vmul.f32 %v355, 1.442695
      %v360 = vpow.pop %v359
      %v361 = vmul.f32 %v356, 1.442695
      %v362 = vpow.pop %v361
      %v366 = vcombine.low %v358, %v360
      %v368 = vunpack.c.l.s4 1966171168
      %v369 = vunpack.c.0.s8 %v368
      %v370 = vlaneseq
      %v371 = vshrl.u32 %v370, 7
      %v372 = vsub.s32 %v369, %v371
      %v373 = vrot.slane %v366, %v372
      %v375 = vunpack.c.l.s4 1966171168
      %v376 = vunpack.c.0.s8 %v375
      %v377 = vlaneseq
      %v378 = vshrl.u32 %v377, 7
      %v379 = vsub.s32 %v376, %v378
      %v380 = vrot.slane %v362, %v379
      %v381 = vcombine.low %v373, %v380
      %v383 = vunpack.c.l.s4 1966171168
      %v384 = vunpack.c.0.s8 %v383
      %v385 = vlaneseq
      %v386 = vshrl.u32 %v385, 7
      %v387 = vsub.s32 %v384, %v386
      %v388 = vrot.slane %v381, %v387
      %v390 = vlaneseq
      %vm391 = vcmp.ge.s32.totalorder %v390, 0
      %vm392 = vcmp.lt.s32.totalorder %v390, 384
      %vm393 = vmand %vm391, %vm392
      %394 = vst.msk [vmem:[%s170] sm:$0x7] %vm393, %v388
      %s395 = smul.u32 3, %s14
      %p396 = scmp.lt.s32.totalorder %s395, 5
      %s397 = scalar_select %p396, %s395, 5
      %s398 = scalar_lea.vmem %s3, %s397
      // Predicated region
      $region33: #{f.1} parent=31 // pred_check
        %p399 = pneg %p100
      $region34: #{f.1} parent=31 // pred_check_branch
        %401 = sbr.rel (%p399) target = $region36
      $region35: #{f.1} parent=31 // pred_region
        %s402 = smul.u32 3, %s14
      $region36: #{f.1} parent=31 // pred_fallthru
        _
    $region32: #{f.1} parent=5 // pred_fallthru
      _
    %p403 = scmp.le.s32.totalorder 2, %s9
    // Predicated region
    $region37: #{f.1} parent=5 // pred_check
      %p404 = pneg %p403
    $region38: #{f.1} parent=5 // pred_check_branch
      %406 = sbr.rel (%p404) target = $region40
    $region39: #{f.1} parent=5 // pred_region
      %s407 = ssub.s32 %s9, 2
      // Predicated region
      $region41: #{f.1} parent=39 // pred_check
        %p408 = pneg %p106
      $region42: #{f.1} parent=39 // pred_check_branch
        %410 = sbr.rel (%p408) target = $region44
      $region43: #{f.1} parent=39 // pred_region
        %s411 = smul.u32 3, %s15
        %p412 = scmp.lt.s32.totalorder %s411, 5
        %s413 = scalar_select %p412, %s411, 5
        %s414 = scalar_lea.vmem %s3, %s413
      $region44: #{f.1} parent=39 // pred_fallthru
        _
    $region40: #{f.1} parent=5 // pred_fallthru
      _
  $region6: #{f.1} parent=0 // loop_footer
    %s13 = sadd.s32 1, %s9
  $region7: #{f.1} parent=0 // loop_footer_branch
    %8 = sbr.rel target = $region3
  $region8: #{f.1} parent=0 // loop_exit
    _

</llo_original>
